<compile_context>
chip_gen: v7x
topology: tpu7x:2x2x1
jax: 0.10.0
libtpu: 0.0.40
codegen_flags: <defaults>
</compile_context>

<pallas_src>
import jax
import jax.numpy as jnp
from jax import lax
from jax.experimental import pallas as pl
from jax.experimental.pallas import tpu as pltpu


def _round_up(x: int, m: int) -> int:
    return ((x + m - 1) // m) * m


def _vmem_capacity_bytes() -> int:
    """Physical VMEM per core; conservative fallback if the query is unavailable."""
    try:
        info = pltpu.get_tpu_info()
        cap = getattr(info, "vmem_capacity_bytes", None)
        if cap:
            return int(cap)
    except Exception:
        pass
    return 64 * 1024 * 1024  # v7x per-TC size; safe lower bound everywhere


def proj_net_linear(audio_feat, weight, bias, *, seq_tile=None, batch_tile=None):
    """Forward of Proj_net (Linear branch).

    audio_feat: (B, S, D_in); weight: (D_in, D_out) (transpose of PyTorch layout);
    bias: (D_out,). Returns (B, D_out) in audio_feat.dtype.
    seq_tile / batch_tile are debug overrides for the tiling heuristics.
    """
    B, S, D_in = audio_feat.shape
    D_in_w, D_out = weight.shape
    assert D_in_w == D_in, "weight first dim must match audio feature dim"
    in_dtype = audio_feat.dtype
    x_itemsize = jnp.dtype(in_dtype).itemsize

    # ---- lane-dense output columns: pad the (tiny) weight/bias, never the input.
    D_out_p = _round_up(D_out, 128)
    if D_out_p != D_out:
        weight = jnp.pad(weight, ((0, 0), (0, D_out_p - D_out)))
        bias = jnp.pad(bias, (0, D_out_p - D_out))
    bias2d = bias.reshape(1, D_out_p)
    w_itemsize = jnp.dtype(weight.dtype).itemsize

    # ---- batch tiling (input is never padded; a ragged last B tile only produces
    #      garbage in output rows that get sliced off below).
    if batch_tile is not None:
        tb = int(batch_tile)
    elif B <= 8:
        tb = B
    else:
        tb = min(64, (B // 8) * 8)
    b_tiles = pl.cdiv(B, tb)
    B_out = b_tiles * tb  # only the tiny f32 output array is padded

    # ---- sequence tiling from a generation-aware VMEM budget.
    sub = max(8, 32 // x_itemsize)       # sublane packing: 8 f32 / 16 bf16 / 32 i8
    vmem_cap = _vmem_capacity_bytes()
    vmem_limit = int(min(max(vmem_cap * 3 // 4, 32 * 1024 * 1024), 100 * 1024 * 1024))
    reserve = (D_in * D_out_p * w_itemsize       # weight (single-buffered)
               + tb * D_in * 4                   # accumulator scratch
               + 2 * tb * D_out_p * 4            # output block (double-buffered)
               + 2 * 1024 * 1024)                # bias + compiler-internal slack
    per_buf = (vmem_limit - reserve) // 2        # streamed input is double-buffered
    per_buf = max(1 * 1024 * 1024, min(per_buf, 16 * 1024 * 1024))

    if seq_tile is not None:
        ts = int(seq_tile)
    elif S <= sub:
        ts = S                                   # block == full dim, always legal
    else:
        ts = per_buf // max(1, tb * D_in * x_itemsize)
        ts = (ts // sub) * sub
        ts = max(sub, min(ts, _round_up(S, sub)))

    num_s_tiles = pl.cdiv(S, ts)
    rem = S - (num_s_tiles - 1) * ts             # valid rows in last S tile (1..ts)
    has_ragged = rem != ts

    # ---- v7x megacore: split the S reduction over 2 parallel programs when the
    #      batch axis alone would leave one TensorCore idle.
    n_split = 2 if (b_tiles == 1 and num_s_tiles >= 2) else 1
    s_tiles_per_split = pl.cdiv(num_s_tiles, n_split)
    has_excess = n_split * s_tiles_per_split > num_s_tiles

    inv_seq_len = 1.0 / float(S)

    def x_index_map(c, i, j):
        gj = c * s_tiles_per_split + j
        if has_excess:
            gj = jnp.minimum(gj, num_s_tiles - 1)   # keep the padded step in-bounds
        return (i, gj, 0)

    def kernel(x_ref, w_ref, b_ref, o_ref, acc_ref):
        # x_ref:   (tb, ts, D_in)   streamed input tile (native dtype)
        # w_ref:   (D_in, D_out_p)  resident weight (single-buffered)
        # b_ref:   (1, D_out_p)     resident bias
        # o_ref:   (tb, D_out_p)    f32 partial output (resident across S steps)
        # acc_ref: (tb, D_in) f32   running seq-sum accumulator
        c = pl.program_id(0)
        s_step = pl.program_id(2)
        gj = c * s_tiles_per_split + s_step          # global S-tile index

        @pl.when(s_step == 0)
        def _():
            acc_ref[...] = jnp.zeros_like(acc_ref)

        def accum_full():
            acc_ref[...] += jnp.sum(x_ref[...], axis=1, dtype=jnp.float32)

        def accum_ragged():
            # Only the last global S tile is ragged; `rem` is static.
            row = lax.broadcasted_iota(jnp.int32, (ts, 1), 0)
            keep = (row < rem)[None]                 # (1, ts, 1)
            xm = jnp.where(keep, x_ref[...], jnp.zeros((), dtype=x_ref.dtype))
            acc_ref[...] += jnp.sum(xm, axis=1, dtype=jnp.float32)

        if not has_ragged and not has_excess:
            accum_full()
        else:
            last_full = num_s_tiles - 1 if has_ragged else num_s_tiles
            pl.when(gj < last_full)(accum_full)
            if has_ragged:
                pl.when(gj == num_s_tiles - 1)(accum_ragged)
            # gj >= num_s_tiles (padded split step): skip accumulation entirely.

        @pl.when(s_step == s_tiles_per_split - 1)
        def _():
            out = jnp.dot(acc_ref[...], w_ref[...].astype(jnp.float32),
                          preferred_element_type=jnp.float32)
            out = out * inv_seq_len
            b_f32 = b_ref[...].astype(jnp.float32)
            if n_split == 1:
                out = out + b_f32
            else:
                out = out + jnp.where(c == 0, 1.0, 0.0) * b_f32
            o_ref[...] = out

    grid = (n_split, b_tiles, s_tiles_per_split)

    parts = pl.pallas_call(
        kernel,
        out_shape=jax.ShapeDtypeStruct((n_split, B_out, D_out_p), jnp.float32),
        grid_spec=pltpu.PrefetchScalarGridSpec(
            num_scalar_prefetch=0,
            grid=grid,
            in_specs=[
                # Streamed input: new tile every (i, j) step, double-buffered.
                pl.BlockSpec((tb, ts, D_in), x_index_map),
                # Resident weight / bias: constant index_map, single-buffered.
                pl.BlockSpec((D_in, D_out_p), lambda c, i, j: (0, 0),
                             pipeline_mode=pl.Buffered(1)),
                pl.BlockSpec((1, D_out_p), lambda c, i, j: (0, 0),
                             pipeline_mode=pl.Buffered(1)),
            ],
            # Output block is resident across the S (reduction) axis.
            out_specs=pl.BlockSpec((None, tb, D_out_p), lambda c, i, j: (c, i, 0)),
            scratch_shapes=[pltpu.VMEM((tb, D_in), jnp.float32)],
        ),
        compiler_params=pltpu.CompilerParams(
            dimension_semantics=("parallel", "parallel", "arbitrary"),
            vmem_limit_bytes=vmem_limit,
        ),
    )(audio_feat, weight, bias2d)

    out = parts[0] if n_split == 1 else jnp.sum(parts, axis=0)
    return out[:B, :D_out].astype(in_dtype)


if __name__ == "__main__":
    key = jax.random.PRNGKey(0)
    k1, k2, k3, k4 = jax.random.split(key, 4)

    # --- check 1: small shapes matching the module's Linear branch ----------
    B, S, IN, OUT = 2, 8, 32, 32
    kx, kw, kb = jax.random.split(k1, 3)
    af = jax.random.normal(kx, (B, S, IN), dtype=jnp.float32)
    bound = 1.0 / (IN ** 0.5)
    w = jax.random.uniform(kw, (IN, OUT), jnp.float32, -bound, bound)
    b = jax.random.uniform(kb, (OUT,), jnp.float32, -bound, bound)

    out = jax.block_until_ready(proj_net_linear(af, w, b))
    ref = (af.sum(1) / S) @ w + b
    assert out.shape == (B, OUT)
    assert jnp.allclose(out, ref, atol=1e-5, rtol=1e-5)

    # --- check 2: non-aligned B / S / D_out (no input padding, D_out pad) ---
    B2, S2, IN2, OUT2 = 3, 40, 96, 200
    kx2, kw2, kb2 = jax.random.split(k2, 3)
    af2 = jax.random.normal(kx2, (B2, S2, IN2), dtype=jnp.float32)
    b2 = 1.0 / (IN2 ** 0.5)
    w2 = jax.random.uniform(kw2, (IN2, OUT2), jnp.float32, -b2, b2)
    bi2 = jax.random.uniform(kb2, (OUT2,), jnp.float32, -b2, b2)
    out2 = jax.block_until_ready(proj_net_linear(af2, w2, bi2))
    ref2 = (af2.sum(1) / S2) @ w2 + bi2
    assert out2.shape == (B2, OUT2)
    assert jnp.allclose(out2, ref2, atol=1e-4, rtol=1e-4)

    # --- check 3: exercise the megacore S-split + in-kernel ragged-S mask ---
    B3, S3, IN3, OUT3 = 2, 40, 32, 48
    kx3, kw3, kb3 = jax.random.split(k3, 3)
    af3 = jax.random.normal(kx3, (B3, S3, IN3), dtype=jnp.float32)
    b3 = 1.0 / (IN3 ** 0.5)
    w3 = jax.random.uniform(kw3, (IN3, OUT3), jnp.float32, -b3, b3)
    bi3 = jax.random.uniform(kb3, (OUT3,), jnp.float32, -b3, b3)
    out3 = jax.block_until_ready(proj_net_linear(af3, w3, bi3, seq_tile=16))
    ref3 = (af3.sum(1) / S3) @ w3 + bi3
    assert out3.shape == (B3, OUT3)
    assert jnp.allclose(out3, ref3, atol=1e-4, rtol=1e-4)

    # --- check 4: multi-B-tile path with a ragged last batch tile -----------
    B4, S4, IN4, OUT4 = 10, 24, 64, 32
    kx4, kw4, kb4 = jax.random.split(k4, 3)
    af4 = jax.random.normal(kx4, (B4, S4, IN4), dtype=jnp.float32)
    b4 = 1.0 / (IN4 ** 0.5)
    w4 = jax.random.uniform(kw4, (IN4, OUT4), jnp.float32, -b4, b4)
    bi4 = jax.random.uniform(kb4, (OUT4,), jnp.float32, -b4, b4)
    out4 = jax.block_until_ready(proj_net_linear(af4, w4, bi4))
    ref4 = (af4.sum(1) / S4) @ w4 + bi4
    assert out4.shape == (B4, OUT4)
    assert jnp.allclose(out4, ref4, atol=1e-4, rtol=1e-4)

    print("KERNEL_OK")
</pallas_src>

<mosaic_0001>
module attributes {stable_mosaic.version = 11 : i64} {
  func.func @kernel(%arg0: i32, %arg1: i32, %arg2: i32, %arg3: memref<2x8x32xf32, #tpu.memory_space<vmem>>, %arg4: memref<32x128xf32, #tpu.memory_space<vmem>>, %arg5: memref<1x128xf32, #tpu.memory_space<vmem>>, %arg6: memref<1x2x128xf32, #tpu.memory_space<vmem>>, %arg7: memref<2x32xf32, #tpu.memory_space<vmem>>) attributes {dimension_semantics = [#tpu.dimension_semantics<parallel>, #tpu.dimension_semantics<parallel>, #tpu.dimension_semantics<arbitrary>], iteration_bounds = array<i64: 1, 1, 1>, scalar_prefetch = 0 : i64, scratch_operands = 1 : i64, tpu.core_type = #tpu.core_type<tc>, window_params = [{transform_indices = @transform_0, window_bounds = array<i64: 2, 8, 32>}, {pipeline_mode = #tpu.pipeline_mode<synchronous>, transform_indices = @transform_1, window_bounds = array<i64: 32, 128>}, {pipeline_mode = #tpu.pipeline_mode<synchronous>, transform_indices = @transform_2, window_bounds = array<i64: 1, 128>}, {transform_indices = @transform_3, window_bounds = array<i64: 1, 2, 128>}]} {
    %c0_i32 = arith.constant 0 : i32
    %0 = arith.cmpi eq, %arg2, %c0_i32 : i32
    %1 = arith.extui %0 : i1 to i32
    %c0_i32_0 = arith.constant 0 : i32
    %2 = arith.cmpi ne, %1, %c0_i32_0 : i32
    scf.if %2 {
      %cst_9 = arith.constant 0.000000e+00 : f32
      %11 = vector.broadcast %cst_9 : f32 to vector<2x32xf32>
      %c0_10 = arith.constant 0 : index
      %c0_11 = arith.constant 0 : index
      %12 = vector.load %arg7[%c0_10, %c0_11] : memref<2x32xf32, #tpu.memory_space<vmem>>, vector<2x32xf32>
      tpu.vector_store %arg7[%c0_10, %c0_11], %11 {strides = array<i32>} : memref<2x32xf32, #tpu.memory_space<vmem>>, vector<2x32xf32>,
    } else {
    }
    %c0 = arith.constant 0 : index
    %c0_1 = arith.constant 0 : index
    %3 = vector.load %arg7[%c0, %c0_1] : memref<2x32xf32, #tpu.memory_space<vmem>>, vector<2x32xf32>
    %c0_2 = arith.constant 0 : index
    %c0_3 = arith.constant 0 : index
    %c0_4 = arith.constant 0 : index
    %4 = vector.load %arg3[%c0_2, %c0_3, %c0_4] : memref<2x8x32xf32, #tpu.memory_space<vmem>>, vector<2x8x32xf32>
    %cst = arith.constant dense<0.000000e+00> : vector<2x32xf32>
    %5 = vector.multi_reduction <add>, %4, %cst [1] : vector<2x8x32xf32> to vector<2x32xf32>
    %6 = arith.addf %3, %5 : vector<2x32xf32>
    %c0_5 = arith.constant 0 : index
    %c0_6 = arith.constant 0 : index
    %7 = vector.load %arg7[%c0_5, %c0_6] : memref<2x32xf32, #tpu.memory_space<vmem>>, vector<2x32xf32>
    tpu.vector_store %arg7[%c0_5, %c0_6], %6 {strides = array<i32>} : memref<2x32xf32, #tpu.memory_space<vmem>>, vector<2x32xf32>,
    %c0_i32_7 = arith.constant 0 : i32
    %8 = arith.cmpi eq, %arg2, %c0_i32_7 : i32
    %9 = arith.extui %8 : i1 to i32
    %c0_i32_8 = arith.constant 0 : i32
    %10 = arith.cmpi ne, %9, %c0_i32_8 : i32
    scf.if %10 {
      %c0_9 = arith.constant 0 : index
      %c0_10 = arith.constant 0 : index
      %11 = vector.load %arg7[%c0_9, %c0_10] : memref<2x32xf32, #tpu.memory_space<vmem>>, vector<2x32xf32>
      %c0_11 = arith.constant 0 : index
      %c0_12 = arith.constant 0 : index
      %12 = vector.load %arg4[%c0_11, %c0_12] : memref<32x128xf32, #tpu.memory_space<vmem>>, vector<32x128xf32>
      %cst_13 = arith.constant dense<0.000000e+00> : vector<2x128xf32>
      %13 = tpu.matmul %11, %12, %cst_13 {dimension_numbers = #tpu.dot_dimension_numbers<[1], [0], [0], [1], [0, 0, 1, 1], [], []>} : vector<2x32xf32>, vector<32x128xf32>, vector<2x128xf32> -> vector<2x128xf32>
      %cst_14 = arith.constant 1.250000e-01 : f32
      %14 = vector.broadcast %cst_14 : f32 to vector<2x128xf32>
      %15 = arith.mulf %13, %14 : vector<2x128xf32>
      %c0_15 = arith.constant 0 : index
      %c0_16 = arith.constant 0 : index
      %16 = vector.load %arg5[%c0_15, %c0_16] : memref<1x128xf32, #tpu.memory_space<vmem>>, vector<1x128xf32>
      %17 = vector.broadcast %16 : vector<1x128xf32> to vector<2x128xf32>
      %18 = arith.addf %15, %17 : vector<2x128xf32>
      %c0_17 = arith.constant 0 : index
      %c0_18 = arith.constant 0 : index
      %c0_19 = arith.constant 0 : index
      %19 = vector.load %arg6[%c0_17, %c0_18, %c0_19] : memref<1x2x128xf32, #tpu.memory_space<vmem>>, vector<1x2x128xf32>
      %20 = vector.shape_cast %19 : vector<1x2x128xf32> to vector<2x128xf32>
      %21 = vector.shape_cast %18 : vector<2x128xf32> to vector<1x2x128xf32>
      tpu.vector_store %arg6[%c0_17, %c0_18, %c0_19], %21 {strides = array<i32>} : memref<1x2x128xf32, #tpu.memory_space<vmem>>, vector<1x2x128xf32>,
    } else {
    }
    return
  }
  func.func @transform_0(%arg0: i32, %arg1: i32, %arg2: i32) -> (i32, i32, i32) {
    %c1_i32 = arith.constant 1 : i32
    %0 = arith.muli %arg0, %c1_i32 : i32
    %1 = arith.addi %0, %arg2 : i32
    %c0_i32 = arith.constant 0 : i32
    %c0_i32_0 = arith.constant 0 : i32
    return %arg1, %1, %c0_i32 : i32, i32, i32
  }
  func.func @transform_1(%arg0: i32, %arg1: i32, %arg2: i32) -> (i32, i32) {
    %c0_i32 = arith.constant 0 : i32
    %c0_i32_0 = arith.constant 0 : i32
    %c0_i32_1 = arith.constant 0 : i32
    return %c0_i32, %c0_i32_0 : i32, i32
  }
  func.func @transform_2(%arg0: i32, %arg1: i32, %arg2: i32) -> (i32, i32) {
    %c0_i32 = arith.constant 0 : i32
    %c0_i32_0 = arith.constant 0 : i32
    %c0_i32_1 = arith.constant 0 : i32
    return %c0_i32, %c0_i32_0 : i32, i32
  }
  func.func @transform_3(%arg0: i32, %arg1: i32, %arg2: i32) -> (i32, i32, i32) {
    %c0_i32 = arith.constant 0 : i32
    %c0_i32_0 = arith.constant 0 : i32
    return %arg0, %arg1, %c0_i32 : i32, i32, i32
  }
}

</mosaic_0001>

<llo_original>
// kernel: tpu_custom_call.1
$region0: #{tpu_custom_call.1}
  #allocation0 [shape = 'u32[]', space=smem, size = 0x4, offset = 0x4, fixed_abs, tag = 'smem constant byte address 0x4 - core index']
  #allocation1 [shape = 'u32[144,128]{1,0:T(1,128)}', space=vmem, size = 0x12000, scoped, tag = 'internal scratch']
  #allocation2 [shape = 'f32[2,32]{1,0:T(2,128)}', space=vmem, size = 0x400, scoped, tag = 'scratch operand']
  %s0 = inlined_call_operand.hbm [shape: f32[2,8,32], index: 0, kind: input, shape index: {}]
  %s1 = inlined_call_operand.hbm [shape: f32[32,128], index: 1, kind: input, shape index: {}]
  %s2 = inlined_call_operand.vmem [shape: f32[1,128], index: 2, kind: input, shape index: {}]
  %s3 = inlined_call_operand.hbm [shape: f32[1,2,128], index: 3, kind: output, shape index: {}]
  %s4 = sld [smem:[#allocation0]]
  $region38: #{tpu_custom_call.1} parent=0
    _
  %s6 = ssub.s32 1, %s4
  %s7 = scalar_select 0, %s6, %s4
  $region1: #{tpu_custom_call.1} parent=0
    #allocation3 [shape = 'u8[8192]{0}', space=vmem, size = 0x2000, scoped, tag = 'input window, operand 0, single buffered']
    #allocation4 [shape = 's32[1]{0}', space=sflag, size = 0x4, scoped, tag = 'scoped memory for tpu_custom_call.1']
    #allocation5 [shape = 's32[1]{0}', space=sflag, size = 0x4, scoped, tag = 'scoped memory for tpu_custom_call.1']
    #allocation6 [shape = 'u8[16384]{0}', space=vmem, size = 0x4000, scoped, tag = 'input window, operand 1, single buffered']
    #allocation7 [shape = 's32[1]{0}', space=sflag, size = 0x4, scoped, tag = 'scoped memory for tpu_custom_call.1']
    #allocation8 [shape = 'u8[1024]{0}', space=vmem, size = 0x400, scoped, tag = 'output window, operand 0, single buffered']
    %8 = vsyncpa [#allocation4], 0
    %9 = vsyncpa [#allocation7], 0
    %10 = vsyncpa [#allocation5], 0
    // Predicated region
    $region2: #{tpu_custom_call.1} parent=1 // pred_check
      _
    $region3: #{tpu_custom_call.1} parent=1 // pred_check_branch
      %12 = sbr.rel (0) target = $region5
    $region4: #{tpu_custom_call.1} parent=1 // pred_region
      %s13 = sadd.s32 0, 0
      %s15 = ssub.s32 256, 256
      %16 = vsyncadd [#allocation4], %s15
      %s17 = smul.addr %s13, 128
      %s18 = scalar_lea.hbm %s0, %s17
      %s19 = sshll.u32 [#allocation3], 4
      %s20 = int_to_ptr.vmem [resolvable:$true] %s19
      %25 = dma.hbm_to_vmem [thread:$0]  %s18, 256, %s20, [#allocation4], 128, 128, 8
    $region5: #{tpu_custom_call.1} parent=1 // pred_fallthru
      _
    // Predicated region
    $region6: #{tpu_custom_call.1} parent=1 // pred_check
      _
    $region7: #{tpu_custom_call.1} parent=1 // pred_check_branch
      %27 = sbr.rel (0) target = $region9
    $region8: #{tpu_custom_call.1} parent=1 // pred_region
      %s29 = ssub.s32 512, 512
      %30 = vsyncadd [#allocation7], %s29
      %s31 = sshll.u32 [#allocation6], 4
      %s32 = int_to_ptr.vmem [resolvable:$true] %s31
      %37 = dma.hbm_to_vmem [thread:$0]  %s1, 512, %s32, [#allocation7], 128, 128, 8
    $region9: #{tpu_custom_call.1} parent=1 // pred_fallthru
      _
    // Predicated region
    $region10: #{tpu_custom_call.1} parent=1 // pred_check
      _
    $region11: #{tpu_custom_call.1} parent=1 // pred_check_branch
      %39 = sbr.rel (0) target = $region13
    $region12: #{tpu_custom_call.1} parent=1 // pred_region
      _
    $region13: #{tpu_custom_call.1} parent=1 // pred_fallthru
      _
    // Predicated region
    $region14: #{tpu_custom_call.1} parent=1 // pred_check
      _
    $region15: #{tpu_custom_call.1} parent=1 // pred_check_branch
      %41 = sbr.rel (0) target = $region17
    $region16: #{tpu_custom_call.1} parent=1 // pred_region
      %42 = dma.done [#allocation4], 256
    $region17: #{tpu_custom_call.1} parent=1 // pred_fallthru
      _
    // Predicated region
    $region18: #{tpu_custom_call.1} parent=1 // pred_check
      _
    $region19: #{tpu_custom_call.1} parent=1 // pred_check_branch
      %44 = sbr.rel (0) target = $region21
    $region20: #{tpu_custom_call.1} parent=1 // pred_region
      %45 = dma.done [#allocation7], 512
    $region21: #{tpu_custom_call.1} parent=1 // pred_fallthru
      _
    %s46 = sadd.s32 0, 0
    %p47 = scmp.eq.s32.totalorder 0, 0
    // Predicated region
    $region22: #{tpu_custom_call.1} parent=1 // pred_check
      %p48 = pneg %p47
    $region23: #{tpu_custom_call.1} parent=1 // pred_check_branch
      %50 = sbr.rel (%p48) target = $region25
    $region24: #{tpu_custom_call.1} parent=1 // pred_region
      %vm51 = vcmask 254976
      %52 = vst.msk [vmem:[#allocation2] sm:$0x3] %vm51, 0.0
    $region25: #{tpu_custom_call.1} parent=1 // pred_fallthru
      _
    %v53 = vld [vmem:[#allocation2] sm:$0x3]
    %v54 = vld [vmem:[#allocation3] sm:$0xff]
    %v55 = vld [vmem:[#allocation3 + $0x8] sm:$0xff]
    %vm56 = vcmask 261120
    %v57 = vsel %vm56, %v54, 0.0
    %v58 = vrot.slane %v57, 4
    %v59 = vadd.f32 %v57, %v58
    %v60 = vrot.slane %v59, 2
    %v61 = vadd.f32 %v59, %v60
    %v62 = vrot.slane %v61, 1
    %v63 = vadd.f32 %v61, %v62
    %v64 = vsel %vm56, %v55, 0.0
    %v65 = vrot.slane %v64, 4
    %v66 = vadd.f32 %v64, %v65
    %v67 = vrot.slane %v66, 2
    %v68 = vadd.f32 %v66, %v67
    %v69 = vrot.slane %v68, 1
    %v70 = vadd.f32 %v68, %v69
    %vm73 = vcmask 1041409
    %v74 = vsel %vm73, %v70, %v63
    %v76 = vadd.f32 %v53, %v74
    %vm77 = vcmask 254976
    %78 = vst.msk [vmem:[#allocation2] sm:$0x3] %vm77, %v76
    // Predicated region
    $region26: #{tpu_custom_call.1} parent=1 // pred_check
      %p79 = pneg %p47
    $region27: #{tpu_custom_call.1} parent=1 // pred_check_branch
      %81 = sbr.rel (%p79) target = $region29
    $region28: #{tpu_custom_call.1} parent=1 // pred_region
      %v82 = vld [vmem:[#allocation2] sm:$0x3]
      %v83 = vld [vmem:[#allocation6] sm:$0xff]
      %v84 = vld [vmem:[#allocation6 + $0x8] sm:$0xff]
      %v85 = vld [vmem:[#allocation6 + $0x10] sm:$0xff]
      %v86 = vld [vmem:[#allocation6 + $0x18] sm:$0xff]
      %v88 = vsel %vm56, %v82, 0
      %90 = vmatprep.subr.mxu0 0.0
      %91 = vmatpush1.msra.mxu0 %v83
      %92 = vmatprep.subr.mxu0 0.0
      %93 = vmatpush1.msra.mxu0 %v84
      %94 = vmatprep.subr.mxu0 0.0
      %95 = vmatpush1.msra.mxu0 %v85
      %96 = vmatprep.subr.mxu0 0.0
      %97 = vmatpush1.msra.mxu0 %v86
      %98 = vmatprep.subr.mxu0 0.0
      %99 = vmatpush1.msra.mxu0 0.0
      %100 = vmatprep.subr.mxu0 0.0
      %101 = vmatpush1.msra.mxu0 0.0
      %102 = vmatprep.subr.mxu0 0.0
      %103 = vmatpush1.msra.mxu0 0.0
      %104 = vmatprep.subr.mxu0 0.0
      %105 = vmatpush1.msra.mxu0 0.0
      %106 = vmatprep.subr.mxu0 0.0
      %107 = vmatpush1.msra.mxu0 0.0
      %108 = vmatprep.subr.mxu0 0.0
      %109 = vmatpush1.msra.mxu0 0.0
      %110 = vmatprep.subr.mxu0 0.0
      %111 = vmatpush1.msra.mxu0 0.0
      %112 = vmatprep.subr.mxu0 0.0
      %113 = vmatpush1.msra.mxu0 0.0
      %114 = vmatprep.subr.mxu0 0.0
      %115 = vmatpush1.msra.mxu0 0.0
      %116 = vmatprep.subr.mxu0 0.0
      %117 = vmatpush1.msra.mxu0 0.0
      %118 = vmatprep.subr.mxu0 0.0
      %119 = vmatpush1.msra.mxu0 0.0
      %120 = vmatprep.subr.mxu0 0.0
      %121 = vmatpush1.msra.mxu0 0.0
      %122 = vmatprep.subr.mxu0 0.0
      %123 = vmatpush1.msra.mxu0 0.0
      %124 = vmatprep.subr.mxu0 0.0
      %125 = vmatpush1.msra.mxu0 0.0
      %126 = vmatprep.subr.mxu0 0.0
      %127 = vmatpush1.msra.mxu0 0.0
      %128 = vmatprep.subr.mxu0 0.0
      %129 = vmatpush1.msra.mxu0 0.0
      %130 = vmatprep.subr.mxu0 0.0
      %131 = vmatpush1.msra.mxu0 0.0
      %132 = vmatprep.subr.mxu0 0.0
      %133 = vmatpush1.msra.mxu0 0.0
      %134 = vmatprep.subr.mxu0 0.0
      %135 = vmatpush1.msra.mxu0 0.0
      %136 = vmatprep.subr.mxu0 0.0
      %137 = vmatpush1.msra.mxu0 0.0
      %138 = vmatprep.subr.mxu0 0.0
      %139 = vmatpush1.msra.mxu0 0.0
      %140 = vmatprep.subr.mxu0 0.0
      %141 = vmatpush1.msra.mxu0 0.0
      %142 = vmatprep.subr.mxu0 0.0
      %143 = vmatpush1.msra.mxu0 0.0
      %144 = vmatprep.subr.mxu0 0.0
      %145 = vmatpush1.msra.mxu0 0.0
      %146 = vmatprep.subr.mxu0 0.0
      %147 = vmatpush1.msra.mxu0 0.0
      %148 = vmatprep.subr.mxu0 0.0
      %149 = vmatpush1.msra.mxu0 0.0
      %150 = vmatprep.subr.mxu0 0.0
      %151 = vmatpush1.msra.mxu0 0.0
      %152 = vmatprep.subr.mxu0 0.0
      %153 = vmatpush1.msra.mxu0 0.0
      %154 = vmatprep.mubr.f32.mxu0 0.0
      %155 = vmatmul.mubr.f32.gmra.mrb[0].mxu0 %v88
      %v156 = vpop.f32.mrb[0].mxu0
      %v157 = vadd.f32 0.0, %v156
      %v158 = vpop.f32.mrb[0].mxu0
      %159 = vdwg.mxu0
      %v160 = vmul.f32 %v157, 0.125
      %v161 = vld [vmem:[%s2] sm:$0x1]
      %v163 = vlaneseq
      %v164 = vshrl.u32 %v163, 7
      %v165 = vsub.s32 0, %v164
      %v166 = vrot.slane %v161, %v165
      %v168 = vadd.f32 %v160, %v166
      %169 = vst [vmem:[#allocation8] sm:$0x3] %v168
    $region29: #{tpu_custom_call.1} parent=1 // pred_fallthru
      _
    // Predicated region
    $region30: #{tpu_custom_call.1} parent=1 // pred_check
      _
    $region31: #{tpu_custom_call.1} parent=1 // pred_check_branch
      %171 = sbr.rel (0) target = $region33
    $region32: #{tpu_custom_call.1} parent=1 // pred_region
      %s173 = ssub.s32 32, 32
      %174 = vsyncadd [#allocation5], %s173
      %s176 = sshll.u32 [#allocation8], 4
      %s177 = int_to_ptr.vmem [resolvable:$true] %s176
      %179 = dma.vmem_to_hbm [thread:$0]  %s177, 32, %s3, [#allocation5]
    $region33: #{tpu_custom_call.1} parent=1 // pred_fallthru
      _
    // Predicated region
    $region34: #{tpu_custom_call.1} parent=1 // pred_check
      _
    $region35: #{tpu_custom_call.1} parent=1 // pred_check_branch
      %181 = sbr.rel (0) target = $region37
    $region36: #{tpu_custom_call.1} parent=1 // pred_region
      %182 = dma.done [#allocation5], 32
    $region37: #{tpu_custom_call.1} parent=1 // pred_fallthru
      _
    %183 = vsyncpa [#allocation4], 1
    %184 = vsyncpa [#allocation7], 1
    %185 = vsyncpa [#allocation5], 1

</llo_original>
